<compile_context>
chip_gen: v7x
topology: tpu7x:2x2x1
jax: 0.10.0
libtpu: 0.0.40
codegen_flags: <defaults>
</compile_context>

<pallas_src>
import jax
import jax.numpy as jnp
from jax.experimental import pallas as pl
from jax.experimental.pallas import tpu as pltpu

_LANE = 128


def _round_up(a, b):
    return (a + b - 1) // b * b


def lr_kernel(bias_ref, w_ref, x_ref, o_ref):
    # bias_ref: (1,)        f32 SMEM  Linear bias
    # w_ref:    (256, 128)  f32 VMEM  selection matrix, w_ref[2j+k, j] = w_k
    # x_ref:    (bt, 256)   f32 VMEM  natural-order rows: 128 batch elements
    #                                 per row as interleaved (x0, x1) pairs
    # o_ref:    (bt, 128)   f32 VMEM  sigmoid(w0*x0 + w1*x1 + b), lane-dense
    #
    # De-interleave + Linear(2, 1) as one MXU matmul (MXU is idle otherwise;
    # the kernel stays HBM-bound).  HIGHEST precision => exact f32 math.
    z = jnp.dot(x_ref[...], w_ref[...],
                preferred_element_type=jnp.float32,
                precision=jax.lax.Precision.HIGHEST)
    z = z + bias_ref[0]
    # Sigmoid as a single EUP op: sigmoid(z) = 0.5 * tanh(0.5*z) + 0.5
    o_ref[...] = 0.5 * jnp.tanh(0.5 * z) + 0.5


def lr_forward(x, weight, bias, block_rows=4096):
    """x: (N, 2) f32, weight: (1, 2) f32, bias: (1,) f32 -> (N, 1) f32."""
    N, K = x.shape
    assert K == 2

    # Pad the batch only to the 128-lane granularity (pure reshape when
    # N % 128 == 0; tiny copy otherwise).  No transpose of x.
    n_pad = _round_up(N, _LANE)
    rows = n_pad // _LANE
    xf = x.astype(jnp.float32)
    if n_pad != N:
        xf = jnp.zeros((n_pad, K), jnp.float32).at[:N].set(xf)
    # Row-major view: row r = batch elements [128r, 128r+128), interleaved.
    x2d = xf.reshape(rows, 2 * _LANE)

    # Selection matrix with the Linear weights folded in:
    #   W[2j + k, j] = weight[k]  =>  (x2d @ W)[r, j] = w0*x0 + w1*x1
    w = weight.reshape(2).astype(jnp.float32)
    wsel = (jnp.eye(_LANE, dtype=jnp.float32)[:, None, :]
            * w[None, :, None]).reshape(2 * _LANE, _LANE)
    b = bias.reshape(1).astype(jnp.float32)

    # Tile: block_rows rows x 128 elements = 512K batch elements per step
    # (~12 MiB double-buffered VMEM); clamp for small batches (full-dim block).
    bt = min(block_rows, rows)
    grid = (pl.cdiv(rows, bt),)  # partial last block OK: tail rows discarded

    out2d = pl.pallas_call(
        lr_kernel,
        out_shape=jax.ShapeDtypeStruct((rows, _LANE), jnp.float32),
        grid=grid,
        in_specs=[
            # Bias scalar lives in SMEM, same every step.
            pl.BlockSpec(memory_space=pltpu.MemorySpace.SMEM),
            # Tiny constant weight/selection matrix (128 KiB), same block.
            pl.BlockSpec((2 * _LANE, _LANE), lambda i: (0, 0)),
            # x tile: natural order, lane+sublane dense, auto double-buffered.
            pl.BlockSpec((bt, 2 * _LANE), lambda i: (i, 0)),
        ],
        out_specs=pl.BlockSpec((bt, _LANE), lambda i: (i, 0)),
        compiler_params=pltpu.CompilerParams(
            dimension_semantics=("parallel",),   # shard batch across TCs (v7x)
            vmem_limit_bytes=32 * 1024 * 1024,
        ),
        cost_estimate=pl.CostEstimate(
            flops=2 * rows * (2 * _LANE) * _LANE,
            transcendentals=rows * _LANE,
            bytes_accessed=(rows * 2 * _LANE + rows * _LANE) * 4,
        ),
    )(b, wsel, x2d)

    # Lane-dense slab back to the module's (N, 1) layout (pure reshape when
    # N % 128 == 0; otherwise a small slice of the padded tail).
    return out2d.reshape(-1)[:N].reshape(N, 1).astype(x.dtype)


if __name__ == "__main__":
    key = jax.random.PRNGKey(0)
    kx, kw, kb = jax.random.split(key, 3)

    # Deterministic parameter init matching nn.Linear(2, 1):
    # U(-1/sqrt(in_features), 1/sqrt(in_features))
    in_features, out_features = 2, 1
    bound = 1.0 / jnp.sqrt(jnp.float32(in_features))
    weight = jax.random.uniform(kw, (out_features, in_features),
                                jnp.float32, -bound, bound)
    bias = jax.random.uniform(kb, (out_features,), jnp.float32, -bound, bound)

    # Small example batch consistent with the module's forward.
    batch = 8
    x = jax.random.normal(kx, (batch, in_features), jnp.float32)

    out = lr_forward(x, weight, bias)
    out = jax.block_until_ready(out)

    # Reference check in plain JAX (same math).
    ref = jax.nn.sigmoid(x @ weight.T + bias)
    assert out.shape == (batch, 1)
    assert jnp.allclose(out, ref, atol=1e-5, rtol=1e-5)

    print("KERNEL_OK")
</pallas_src>

<mosaic_0001>
module attributes {stable_mosaic.version = 11 : i64} {
  func.func @lr_kernel(%arg0: i32, %arg1: memref<1xf32, #tpu.memory_space<smem>>, %arg2: memref<256x128xf32, #tpu.memory_space<vmem>>, %arg3: memref<1x256xf32, #tpu.memory_space<vmem>>, %arg4: memref<1x128xf32, #tpu.memory_space<vmem>>) attributes {dimension_semantics = [#tpu.dimension_semantics<parallel>], iteration_bounds = array<i64: 1>, scalar_prefetch = 0 : i64, scratch_operands = 0 : i64, tpu.core_type = #tpu.core_type<tc>, window_params = [{transform_indices = @transform_0, window_bounds = array<i64: 1>}, {pipeline_mode = #tpu.pipeline_mode<synchronous>, transform_indices = @transform_1, window_bounds = array<i64: 256, 128>}, {transform_indices = @transform_2, window_bounds = array<i64: 1, 256>}, {transform_indices = @transform_3, window_bounds = array<i64: 1, 128>}]} {
    %c0 = arith.constant 0 : index
    %c0_0 = arith.constant 0 : index
    %0 = vector.load %arg3[%c0, %c0_0] : memref<1x256xf32, #tpu.memory_space<vmem>>, vector<1x256xf32>
    %c0_1 = arith.constant 0 : index
    %c0_2 = arith.constant 0 : index
    %1 = vector.load %arg2[%c0_1, %c0_2] : memref<256x128xf32, #tpu.memory_space<vmem>>, vector<256x128xf32>
    %cst = arith.constant dense<0.000000e+00> : vector<1x128xf32>
    %2 = tpu.matmul %0, %1, %cst {dimension_numbers = #tpu.dot_dimension_numbers<[1], [0], [0], [1], [0, 0, 1, 1], [], []>, precision = #tpu.contract_precision<fp32>} : vector<1x256xf32>, vector<256x128xf32>, vector<1x128xf32> -> vector<1x128xf32>
    %c0_3 = arith.constant 0 : index
    %3 = memref.load %arg1[%c0_3] : memref<1xf32, #tpu.memory_space<smem>>
    %4 = vector.broadcast %3 : f32 to vector<1x128xf32>
    %5 = arith.addf %2, %4 : vector<1x128xf32>
    %cst_4 = arith.constant 5.000000e-01 : f32
    %6 = vector.broadcast %cst_4 : f32 to vector<1x128xf32>
    %7 = arith.mulf %6, %5 : vector<1x128xf32>
    %8 = math.tanh %7 : vector<1x128xf32>
    %cst_5 = arith.constant 5.000000e-01 : f32
    %9 = vector.broadcast %cst_5 : f32 to vector<1x128xf32>
    %10 = arith.mulf %9, %8 : vector<1x128xf32>
    %cst_6 = arith.constant 5.000000e-01 : f32
    %11 = vector.broadcast %cst_6 : f32 to vector<1x128xf32>
    %12 = arith.addf %10, %11 : vector<1x128xf32>
    %c0_7 = arith.constant 0 : index
    %c0_8 = arith.constant 0 : index
    %13 = vector.load %arg4[%c0_7, %c0_8] : memref<1x128xf32, #tpu.memory_space<vmem>>, vector<1x128xf32>
    tpu.vector_store %arg4[%c0_7, %c0_8], %12 {strides = array<i32>} : memref<1x128xf32, #tpu.memory_space<vmem>>, vector<1x128xf32>,
    return
  }
  func.func @transform_0(%arg0: i32) -> i32 {
    %c0_i32 = arith.constant 0 : i32
    %c0_i32_0 = arith.constant 0 : i32
    return %c0_i32 : i32
  }
  func.func @transform_1(%arg0: i32) -> (i32, i32) {
    %c0_i32 = arith.constant 0 : i32
    %c0_i32_0 = arith.constant 0 : i32
    %c0_i32_1 = arith.constant 0 : i32
    return %c0_i32, %c0_i32_0 : i32, i32
  }
  func.func @transform_2(%arg0: i32) -> (i32, i32) {
    %c0_i32 = arith.constant 0 : i32
    %c0_i32_0 = arith.constant 0 : i32
    return %arg0, %c0_i32 : i32, i32
  }
  func.func @transform_3(%arg0: i32) -> (i32, i32) {
    %c0_i32 = arith.constant 0 : i32
    %c0_i32_0 = arith.constant 0 : i32
    return %arg0, %c0_i32 : i32, i32
  }
}

</mosaic_0001>

<llo_original>
// kernel: tpu_custom_call.1
$region0: #{tpu_custom_call.1}
  #allocation0 [shape = 'u32[]', space=smem, size = 0x4, offset = 0x4, fixed_abs, tag = 'smem constant byte address 0x4 - core index']
  #allocation1 [shape = 'u32[144,128]{1,0:T(1,128)}', space=vmem, size = 0x12000, scoped, tag = 'internal scratch']
  #allocation2 [shape = 'f32[1]{0:T(128)S(6)}', space=smem, size = 0x200, scoped, tag = 'scoped memory for tpu_custom_call.1']
  %s0 = inlined_call_operand.<no memory space> [shape: f32[1], index: 0, kind: input, shape index: {}]
  %s1 = inlined_call_operand.hbm [shape: f32[256,128], index: 1, kind: input, shape index: {}]
  %s2 = inlined_call_operand.vmem [shape: f32[1,256], index: 2, kind: input, shape index: {}]
  %s3 = inlined_call_operand.hbm [shape: f32[1,128], index: 3, kind: output, shape index: {}]
  %s4 = sld [smem:[#allocation0]]
  $region26: #{tpu_custom_call.1} parent=0
    _
  %s6 = ssub.s32 1, %s4
  %s7 = scalar_select 0, %s6, %s4
  %8 = sst [smem:[#allocation2]] %s0
  $region1: #{tpu_custom_call.1} parent=0
    #allocation3 [shape = 'u8[131072]{0}', space=vmem, size = 0x20000, scoped, tag = 'input window, operand 1, single buffered']
    #allocation4 [shape = 's32[1]{0}', space=sflag, size = 0x4, scoped, tag = 'scoped memory for tpu_custom_call.1']
    #allocation5 [shape = 's32[1]{0}', space=sflag, size = 0x4, scoped, tag = 'scoped memory for tpu_custom_call.1']
    #allocation6 [shape = 'u8[512]{0}', space=vmem, size = 0x400, scoped, tag = 'output window, operand 0, single buffered']
    %9 = vsyncpa [#allocation4], 0
    %10 = vsyncpa [#allocation5], 0
    // Predicated region
    $region2: #{tpu_custom_call.1} parent=1 // pred_check
      _
    $region3: #{tpu_custom_call.1} parent=1 // pred_check_branch
      %12 = sbr.rel (0) target = $region5
    $region4: #{tpu_custom_call.1} parent=1 // pred_region
      _
    $region5: #{tpu_custom_call.1} parent=1 // pred_fallthru
      _
    // Predicated region
    $region6: #{tpu_custom_call.1} parent=1 // pred_check
      _
    $region7: #{tpu_custom_call.1} parent=1 // pred_check_branch
      %14 = sbr.rel (0) target = $region9
    $region8: #{tpu_custom_call.1} parent=1 // pred_region
      %s16 = ssub.s32 4096, 4096
      %17 = vsyncadd [#allocation4], %s16
      %s18 = sshll.u32 [#allocation3], 4
      %s19 = int_to_ptr.vmem [resolvable:$true] %s18
      %24 = dma.hbm_to_vmem [thread:$0]  %s1, 4096, %s19, [#allocation4], 128, 128, 8
    $region9: #{tpu_custom_call.1} parent=1 // pred_fallthru
      _
    // Predicated region
    $region10: #{tpu_custom_call.1} parent=1 // pred_check
      _
    $region11: #{tpu_custom_call.1} parent=1 // pred_check_branch
      %26 = sbr.rel (0) target = $region13
    $region12: #{tpu_custom_call.1} parent=1 // pred_region
      _
    $region13: #{tpu_custom_call.1} parent=1 // pred_fallthru
      _
    // Predicated region
    $region14: #{tpu_custom_call.1} parent=1 // pred_check
      _
    $region15: #{tpu_custom_call.1} parent=1 // pred_check_branch
      %28 = sbr.rel (0) target = $region17
    $region16: #{tpu_custom_call.1} parent=1 // pred_region
      %29 = dma.done [#allocation4], 4096
    $region17: #{tpu_custom_call.1} parent=1 // pred_fallthru
      _
    %v30 = vld [vmem:[%s2] sm:$0x3]
    %v31 = vld [vmem:[#allocation3] sm:$0xff]
    %v32 = vld [vmem:[#allocation3 + $0x8] sm:$0xff]
    %v33 = vld [vmem:[#allocation3 + $0x10] sm:$0xff]
    %v34 = vld [vmem:[#allocation3 + $0x18] sm:$0xff]
    %v35 = vld [vmem:[#allocation3 + $0x20] sm:$0xff]
    %v36 = vld [vmem:[#allocation3 + $0x28] sm:$0xff]
    %v37 = vld [vmem:[#allocation3 + $0x30] sm:$0xff]
    %v38 = vld [vmem:[#allocation3 + $0x38] sm:$0xff]
    %v39 = vld [vmem:[#allocation3 + $0x40] sm:$0xff]
    %v40 = vld [vmem:[#allocation3 + $0x48] sm:$0xff]
    %v41 = vld [vmem:[#allocation3 + $0x50] sm:$0xff]
    %v42 = vld [vmem:[#allocation3 + $0x58] sm:$0xff]
    %v43 = vld [vmem:[#allocation3 + $0x60] sm:$0xff]
    %v44 = vld [vmem:[#allocation3 + $0x68] sm:$0xff]
    %v45 = vld [vmem:[#allocation3 + $0x70] sm:$0xff]
    %v46 = vld [vmem:[#allocation3 + $0x78] sm:$0xff]
    %v47 = vld [vmem:[#allocation3 + $0x80] sm:$0xff]
    %v48 = vld [vmem:[#allocation3 + $0x88] sm:$0xff]
    %v49 = vld [vmem:[#allocation3 + $0x90] sm:$0xff]
    %v50 = vld [vmem:[#allocation3 + $0x98] sm:$0xff]
    %v51 = vld [vmem:[#allocation3 + $0xa0] sm:$0xff]
    %v52 = vld [vmem:[#allocation3 + $0xa8] sm:$0xff]
    %v53 = vld [vmem:[#allocation3 + $0xb0] sm:$0xff]
    %v54 = vld [vmem:[#allocation3 + $0xb8] sm:$0xff]
    %v55 = vld [vmem:[#allocation3 + $0xc0] sm:$0xff]
    %v56 = vld [vmem:[#allocation3 + $0xc8] sm:$0xff]
    %v57 = vld [vmem:[#allocation3 + $0xd0] sm:$0xff]
    %v58 = vld [vmem:[#allocation3 + $0xd8] sm:$0xff]
    %v59 = vld [vmem:[#allocation3 + $0xe0] sm:$0xff]
    %v60 = vld [vmem:[#allocation3 + $0xe8] sm:$0xff]
    %v61 = vld [vmem:[#allocation3 + $0xf0] sm:$0xff]
    %v62 = vld [vmem:[#allocation3 + $0xf8] sm:$0xff]
    %s63 = sld [smem:[#allocation2]]
    %v64 = vstv %s63
    %v66 = vlaneseq
    %v67 = vshrl.u32 %v66, 7
    %v68 = vsub.s32 0, %v67
    %v69 = vrot.slane %v30, %v68
    %v70 = vlaneseq
    %v71 = vshrl.u32 %v70, 7
    %v72 = vsub.s32 1, %v71
    %v73 = vrot.slane %v30, %v72
    %76 = vmatprep.subr.mxu0 0.0
    %v77 = vand.u32 %v31, 4294901760
    %78 = vmatpush1.msra.mxu0 %v77
    %79 = vmatprep.subr.mxu0 0.0
    %v80 = vand.u32 %v32, 4294901760
    %81 = vmatpush1.msra.mxu0 %v80
    %82 = vmatprep.subr.mxu0 0.0
    %v83 = vand.u32 %v33, 4294901760
    %84 = vmatpush1.msra.mxu0 %v83
    %85 = vmatprep.subr.mxu0 0.0
    %v86 = vand.u32 %v34, 4294901760
    %87 = vmatpush1.msra.mxu0 %v86
    %88 = vmatprep.subr.mxu0 0.0
    %v89 = vand.u32 %v35, 4294901760
    %90 = vmatpush1.msra.mxu0 %v89
    %91 = vmatprep.subr.mxu0 0.0
    %v92 = vand.u32 %v36, 4294901760
    %93 = vmatpush1.msra.mxu0 %v92
    %94 = vmatprep.subr.mxu0 0.0
    %v95 = vand.u32 %v37, 4294901760
    %96 = vmatpush1.msra.mxu0 %v95
    %97 = vmatprep.subr.mxu0 0.0
    %v98 = vand.u32 %v38, 4294901760
    %99 = vmatpush1.msra.mxu0 %v98
    %100 = vmatprep.subr.mxu0 0.0
    %v101 = vand.u32 %v39, 4294901760
    %102 = vmatpush1.msra.mxu0 %v101
    %103 = vmatprep.subr.mxu0 0.0
    %v104 = vand.u32 %v40, 4294901760
    %105 = vmatpush1.msra.mxu0 %v104
    %106 = vmatprep.subr.mxu0 0.0
    %v107 = vand.u32 %v41, 4294901760
    %108 = vmatpush1.msra.mxu0 %v107
    %109 = vmatprep.subr.mxu0 0.0
    %v110 = vand.u32 %v42, 4294901760
    %111 = vmatpush1.msra.mxu0 %v110
    %112 = vmatprep.subr.mxu0 0.0
    %v113 = vand.u32 %v43, 4294901760
    %114 = vmatpush1.msra.mxu0 %v113
    %115 = vmatprep.subr.mxu0 0.0
    %v116 = vand.u32 %v44, 4294901760
    %117 = vmatpush1.msra.mxu0 %v116
    %118 = vmatprep.subr.mxu0 0.0
    %v119 = vand.u32 %v45, 4294901760
    %120 = vmatpush1.msra.mxu0 %v119
    %121 = vmatprep.subr.mxu0 0.0
    %v122 = vand.u32 %v46, 4294901760
    %123 = vmatpush1.msra.mxu0 %v122
    %124 = vmatprep.subr.mxu0 0.0
    %v125 = vand.u32 %v47, 4294901760
    %126 = vmatpush1.msra.mxu0 %v125
    %127 = vmatprep.subr.mxu0 0.0
    %v128 = vand.u32 %v48, 4294901760
    %129 = vmatpush1.msra.mxu0 %v128
    %130 = vmatprep.subr.mxu0 0.0
    %v131 = vand.u32 %v49, 4294901760
    %132 = vmatpush1.msra.mxu0 %v131
    %133 = vmatprep.subr.mxu0 0.0
    %v134 = vand.u32 %v50, 4294901760
    %135 = vmatpush1.msra.mxu0 %v134
    %136 = vmatprep.subr.mxu0 0.0
    %v137 = vand.u32 %v51, 4294901760
    %138 = vmatpush1.msra.mxu0 %v137
    %139 = vmatprep.subr.mxu0 0.0
    %v140 = vand.u32 %v52, 4294901760
    %141 = vmatpush1.msra.mxu0 %v140
    %142 = vmatprep.subr.mxu0 0.0
    %v143 = vand.u32 %v53, 4294901760
    %144 = vmatpush1.msra.mxu0 %v143
    %145 = vmatprep.subr.mxu0 0.0
    %v146 = vand.u32 %v54, 4294901760
    %147 = vmatpush1.msra.mxu0 %v146
    %148 = vmatprep.subr.mxu0 0.0
    %v149 = vand.u32 %v55, 4294901760
    %150 = vmatpush1.msra.mxu0 %v149
    %151 = vmatprep.subr.mxu0 0.0
    %v152 = vand.u32 %v56, 4294901760
    %153 = vmatpush1.msra.mxu0 %v152
    %154 = vmatprep.subr.mxu0 0.0
    %v155 = vand.u32 %v57, 4294901760
    %156 = vmatpush1.msra.mxu0 %v155
    %157 = vmatprep.subr.mxu0 0.0
    %v158 = vand.u32 %v58, 4294901760
    %159 = vmatpush1.msra.mxu0 %v158
    %160 = vmatprep.subr.mxu0 0.0
    %v161 = vand.u32 %v59, 4294901760
    %162 = vmatpush1.msra.mxu0 %v161
    %163 = vmatprep.subr.mxu0 0.0
    %v164 = vand.u32 %v60, 4294901760
    %165 = vmatpush1.msra.mxu0 %v164
    %166 = vmatprep.subr.mxu0 0.0
    %v167 = vand.u32 %v61, 4294901760
    %168 = vmatpush1.msra.mxu0 %v167
    %169 = vmatprep.subr.mxu0 0.0
    %v170 = vand.u32 %v62, 4294901760
    %171 = vmatpush1.msra.mxu0 %v170
    %v172 = vand.u32 %v73, 4294901760
    %v173 = vsub.f32 %v73, %v172
    %v174 = vand.u32 %v173, 4294901760
    %v175 = vsub.f32 %v173, %v174
    %v176 = vand.u32 %v175, 4294901760
    %177 = vmatprep.mubr.f32.mxu0 %v176
    %v178 = vand.u32 %v69, 4294901760
    %v179 = vsub.f32 %v69, %v178
    %v180 = vand.u32 %v179, 4294901760
    %v181 = vsub.f32 %v179, %v180
    %v182 = vand.u32 %v181, 4294901760
    %183 = vmatmul.mubr.f32.gmra.mrb[0].mxu0 %v182
    %v184 = vpop.f32.mrb[0].mxu0
    %v185 = vadd.f32 %v64, %v184
    %v186 = vpop.f32.mrb[0].mxu0
    %187 = vdwg.mxu0
    %188 = vmatprep.subr.mxu0 0.0
    %v189 = vand.u32 %v31, 4294901760
    %v190 = vsub.f32 %v31, %v189
    %v191 = vand.u32 %v190, 4294901760
    %v192 = vsub.f32 %v190, %v191
    %v193 = vand.u32 %v192, 4294901760
    %194 = vmatpush1.msra.mxu0 %v193
    %195 = vmatprep.subr.mxu0 0.0
    %v196 = vand.u32 %v32, 4294901760
    %v197 = vsub.f32 %v32, %v196
    %v198 = vand.u32 %v197, 4294901760
    %v199 = vsub.f32 %v197, %v198
    %v200 = vand.u32 %v199, 4294901760
    %201 = vmatpush1.msra.mxu0 %v200
    %202 = vmatprep.subr.mxu0 0.0
    %v203 = vand.u32 %v33, 4294901760
    %v204 = vsub.f32 %v33, %v203
    %v205 = vand.u32 %v204, 4294901760
    %v206 = vsub.f32 %v204, %v205
    %v207 = vand.u32 %v206, 4294901760
    %208 = vmatpush1.msra.mxu0 %v207
    %209 = vmatprep.subr.mxu0 0.0
    %v210 = vand.u32 %v34, 4294901760
    %v211 = vsub.f32 %v34, %v210
    %v212 = vand.u32 %v211, 4294901760
    %v213 = vsub.f32 %v211, %v212
    %v214 = vand.u32 %v213, 4294901760
    %215 = vmatpush1.msra.mxu0 %v214
    %216 = vmatprep.subr.mxu0 0.0
    %v217 = vand.u32 %v35, 4294901760
    %v218 = vsub.f32 %v35, %v217
    %v219 = vand.u32 %v218, 4294901760
    %v220 = vsub.f32 %v218, %v219
    %v221 = vand.u32 %v220, 4294901760
    %222 = vmatpush1.msra.mxu0 %v221
    %223 = vmatprep.subr.mxu0 0.0
    %v224 = vand.u32 %v36, 4294901760
    %v225 = vsub.f32 %v36, %v224
    %v226 = vand.u32 %v225, 4294901760
    %v227 = vsub.f32 %v225, %v226
    %v228 = vand.u32 %v227, 4294901760
    %229 = vmatpush1.msra.mxu0 %v228
    %230 = vmatprep.subr.mxu0 0.0
    %v231 = vand.u32 %v37, 4294901760
    %v232 = vsub.f32 %v37, %v231
    %v233 = vand.u32 %v232, 4294901760
    %v234 = vsub.f32 %v232, %v233
    %v235 = vand.u32 %v234, 4294901760
    %236 = vmatpush1.msra.mxu0 %v235
    %237 = vmatprep.subr.mxu0 0.0
    %v238 = vand.u32 %v38, 4294901760
    %v239 = vsub.f32 %v38, %v238
    %v240 = vand.u32 %v239, 4294901760
    %v241 = vsub.f32 %v239, %v240
    %v242 = vand.u32 %v241, 4294901760
    %243 = vmatpush1.msra.mxu0 %v242
    %244 = vmatprep.subr.mxu0 0.0
    %v245 = vand.u32 %v39, 4294901760
    %v246 = vsub.f32 %v39, %v245
    %v247 = vand.u32 %v246, 4294901760
    %v248 = vsub.f32 %v246, %v247
    %v249 = vand.u32 %v248, 4294901760
    %250 = vmatpush1.msra.mxu0 %v249
    %251 = vmatprep.subr.mxu0 0.0
    %v252 = vand.u32 %v40, 4294901760
    %v253 = vsub.f32 %v40, %v252
    %v254 = vand.u32 %v253, 4294901760
    %v255 = vsub.f32 %v253, %v254
    %v256 = vand.u32 %v255, 4294901760
    %257 = vmatpush1.msra.mxu0 %v256
    %258 = vmatprep.subr.mxu0 0.0
    %v259 = vand.u32 %v41, 4294901760
    %v260 = vsub.f32 %v41, %v259
    %v261 = vand.u32 %v260, 4294901760
    %v262 = vsub.f32 %v260, %v261
    %v263 = vand.u32 %v262, 4294901760
    %264 = vmatpush1.msra.mxu0 %v263
    %265 = vmatprep.subr.mxu0 0.0
    %v266 = vand.u32 %v42, 4294901760
    %v267 = vsub.f32 %v42, %v266
    %v268 = vand.u32 %v267, 4294901760
    %v269 = vsub.f32 %v267, %v268
    %v270 = vand.u32 %v269, 4294901760
    %271 = vmatpush1.msra.mxu0 %v270
    %272 = vmatprep.subr.mxu0 0.0
    %v273 = vand.u32 %v43, 4294901760
    %v274 = vsub.f32 %v43, %v273
    %v275 = vand.u32 %v274, 4294901760
    %v276 = vsub.f32 %v274, %v275
    %v277 = vand.u32 %v276, 4294901760
    %278 = vmatpush1.msra.mxu0 %v277
    %279 = vmatprep.subr.mxu0 0.0
    %v280 = vand.u32 %v44, 4294901760
    %v281 = vsub.f32 %v44, %v280
    %v282 = vand.u32 %v281, 4294901760
    %v283 = vsub.f32 %v281, %v282
    %v284 = vand.u32 %v283, 4294901760
    %285 = vmatpush1.msra.mxu0 %v284
    %286 = vmatprep.subr.mxu0 0.0
    %v287 = vand.u32 %v45, 4294901760
    %v288 = vsub.f32 %v45, %v287
    %v289 = vand.u32 %v288, 4294901760
    %v290 = vsub.f32 %v288, %v289
    %v291 = vand.u32 %v290, 4294901760
    %292 = vmatpush1.msra.mxu0 %v291
    %293 = vmatprep.subr.mxu0 0.0
    %v294 = vand.u32 %v46, 4294901760
    %v295 = vsub.f32 %v46, %v294
    %v296 = vand.u32 %v295, 4294901760
    %v297 = vsub.f32 %v295, %v296
    %v298 = vand.u32 %v297, 4294901760
    %299 = vmatpush1.msra.mxu0 %v298
    %300 = vmatprep.subr.mxu0 0.0
    %v301 = vand.u32 %v47, 4294901760
    %v302 = vsub.f32 %v47, %v301
    %v303 = vand.u32 %v302, 4294901760
    %v304 = vsub.f32 %v302, %v303
    %v305 = vand.u32 %v304, 4294901760
    %306 = vmatpush1.msra.mxu0 %v305
    %307 = vmatprep.subr.mxu0 0.0
    %v308 = vand.u32 %v48, 4294901760
    %v309 = vsub.f32 %v48, %v308
    %v310 = vand.u32 %v309, 4294901760
    %v311 = vsub.f32 %v309, %v310
    %v312 = vand.u32 %v311, 4294901760
    %313 = vmatpush1.msra.mxu0 %v312
    %314 = vmatprep.subr.mxu0 0.0
    %v315 = vand.u32 %v49, 4294901760
    %v316 = vsub.f32 %v49, %v315
    %v317 = vand.u32 %v316, 4294901760
    %v318 = vsub.f32 %v316, %v317
    %v319 = vand.u32 %v318, 4294901760
    %320 = vmatpush1.msra.mxu0 %v319
    %321 = vmatprep.subr.mxu0 0.0
    %v322 = vand.u32 %v50, 4294901760
    %v323 = vsub.f32 %v50, %v322
    %v324 = vand.u32 %v323, 4294901760
    %v325 = vsub.f32 %v323, %v324
    %v326 = vand.u32 %v325, 4294901760
    %327 = vmatpush1.msra.mxu0 %v326
    %328 = vmatprep.subr.mxu0 0.0
    %v329 = vand.u32 %v51, 4294901760
    %v330 = vsub.f32 %v51, %v329
    %v331 = vand.u32 %v330, 4294901760
    %v332 = vsub.f32 %v330, %v331
    %v333 = vand.u32 %v332, 4294901760
    %334 = vmatpush1.msra.mxu0 %v333
    %335 = vmatprep.subr.mxu0 0.0
    %v336 = vand.u32 %v52, 4294901760
    %v337 = vsub.f32 %v52, %v336
    %v338 = vand.u32 %v337, 4294901760
    %v339 = vsub.f32 %v337, %v338
    %v340 = vand.u32 %v339, 4294901760
    %341 = vmatpush1.msra.mxu0 %v340
    %342 = vmatprep.subr.mxu0 0.0
    %v343 = vand.u32 %v53, 4294901760
    %v344 = vsub.f32 %v53, %v343
    %v345 = vand.u32 %v344, 4294901760
    %v346 = vsub.f32 %v344, %v345
    %v347 = vand.u32 %v346, 4294901760
    %348 = vmatpush1.msra.mxu0 %v347
    %349 = vmatprep.subr.mxu0 0.0
    %v350 = vand.u32 %v54, 4294901760
    %v351 = vsub.f32 %v54, %v350
    %v352 = vand.u32 %v351, 4294901760
    %v353 = vsub.f32 %v351, %v352
    %v354 = vand.u32 %v353, 4294901760
    %355 = vmatpush1.msra.mxu0 %v354
    %356 = vmatprep.subr.mxu0 0.0
    %v357 = vand.u32 %v55, 4294901760
    %v358 = vsub.f32 %v55, %v357
    %v359 = vand.u32 %v358, 4294901760
    %v360 = vsub.f32 %v358, %v359
    %v361 = vand.u32 %v360, 4294901760
    %362 = vmatpush1.msra.mxu0 %v361
    %363 = vmatprep.subr.mxu0 0.0
    %v364 = vand.u32 %v56, 4294901760
    %v365 = vsub.f32 %v56, %v364
    %v366 = vand.u32 %v365, 4294901760
    %v367 = vsub.f32 %v365, %v366
    %v368 = vand.u32 %v367, 4294901760
    %369 = vmatpush1.msra.mxu0 %v368
    %370 = vmatprep.subr.mxu0 0.0
    %v371 = vand.u32 %v57, 4294901760
    %v372 = vsub.f32 %v57, %v371
    %v373 = vand.u32 %v372, 4294901760
    %v374 = vsub.f32 %v372, %v373
    %v375 = vand.u32 %v374, 4294901760
    %376 = vmatpush1.msra.mxu0 %v375
    %377 = vmatprep.subr.mxu0 0.0
    %v378 = vand.u32 %v58, 4294901760
    %v379 = vsub.f32 %v58, %v378
    %v380 = vand.u32 %v379, 4294901760
    %v381 = vsub.f32 %v379, %v380
    %v382 = vand.u32 %v381, 4294901760
    %383 = vmatpush1.msra.mxu0 %v382
    %384 = vmatprep.subr.mxu0 0.0
    %v385 = vand.u32 %v59, 4294901760
    %v386 = vsub.f32 %v59, %v385
    %v387 = vand.u32 %v386, 4294901760
    %v388 = vsub.f32 %v386, %v387
    %v389 = vand.u32 %v388, 4294901760
    %390 = vmatpush1.msra.mxu0 %v389
    %391 = vmatprep.subr.mxu0 0.0
    %v392 = vand.u32 %v60, 4294901760
    %v393 = vsub.f32 %v60, %v392
    %v394 = vand.u32 %v393, 4294901760
    %v395 = vsub.f32 %v393, %v394
    %v396 = vand.u32 %v395, 4294901760
    %397 = vmatpush1.msra.mxu0 %v396
    %398 = vmatprep.subr.mxu0 0.0
    %v399 = vand.u32 %v61, 4294901760
    %v400 = vsub.f32 %v61, %v399
    %v401 = vand.u32 %v400, 4294901760
    %v402 = vsub.f32 %v400, %v401
    %v403 = vand.u32 %v402, 4294901760
    %404 = vmatpush1.msra.mxu0 %v403
    %405 = vmatprep.subr.mxu0 0.0
    %v406 = vand.u32 %v62, 4294901760
    %v407 = vsub.f32 %v62, %v406
    %v408 = vand.u32 %v407, 4294901760
    %v409 = vsub.f32 %v407, %v408
    %v410 = vand.u32 %v409, 4294901760
    %411 = vmatpush1.msra.mxu0 %v410
    %v412 = vand.u32 %v73, 4294901760
    %413 = vmatprep.mubr.f32.mxu0 %v412
    %v414 = vand.u32 %v69, 4294901760
    %415 = vmatmul.mubr.f32.gmra.mrb[0].mxu0 %v414
    %v416 = vpop.f32.mrb[0].mxu0
    %v417 = vadd.f32 %v185, %v416
    %v418 = vpop.f32.mrb[0].mxu0
    %419 = vdwg.mxu0
    %420 = vmatprep.subr.mxu0 0.0
    %v421 = vand.u32 %v31, 4294901760
    %v422 = vsub.f32 %v31, %v421
    %423 = vmatpush1.msra.mxu0 %v422
    %424 = vmatprep.subr.mxu0 0.0
    %v425 = vand.u32 %v32, 4294901760
    %v426 = vsub.f32 %v32, %v425
    %427 = vmatpush1.msra.mxu0 %v426
    %428 = vmatprep.subr.mxu0 0.0
    %v429 = vand.u32 %v33, 4294901760
    %v430 = vsub.f32 %v33, %v429
    %431 = vmatpush1.msra.mxu0 %v430
    %432 = vmatprep.subr.mxu0 0.0
    %v433 = vand.u32 %v34, 4294901760
    %v434 = vsub.f32 %v34, %v433
    %435 = vmatpush1.msra.mxu0 %v434
    %436 = vmatprep.subr.mxu0 0.0
    %v437 = vand.u32 %v35, 4294901760
    %v438 = vsub.f32 %v35, %v437
    %439 = vmatpush1.msra.mxu0 %v438
    %440 = vmatprep.subr.mxu0 0.0
    %v441 = vand.u32 %v36, 4294901760
    %v442 = vsub.f32 %v36, %v441
    %443 = vmatpush1.msra.mxu0 %v442
    %444 = vmatprep.subr.mxu0 0.0
    %v445 = vand.u32 %v37, 4294901760
    %v446 = vsub.f32 %v37, %v445
    %447 = vmatpush1.msra.mxu0 %v446
    %448 = vmatprep.subr.mxu0 0.0
    %v449 = vand.u32 %v38, 4294901760
    %v450 = vsub.f32 %v38, %v449
    %451 = vmatpush1.msra.mxu0 %v450
    %452 = vmatprep.subr.mxu0 0.0
    %v453 = vand.u32 %v39, 4294901760
    %v454 = vsub.f32 %v39, %v453
    %455 = vmatpush1.msra.mxu0 %v454
    %456 = vmatprep.subr.mxu0 0.0
    %v457 = vand.u32 %v40, 4294901760
    %v458 = vsub.f32 %v40, %v457
    %459 = vmatpush1.msra.mxu0 %v458
    %460 = vmatprep.subr.mxu0 0.0
    %v461 = vand.u32 %v41, 4294901760
    %v462 = vsub.f32 %v41, %v461
    %463 = vmatpush1.msra.mxu0 %v462
    %464 = vmatprep.subr.mxu0 0.0
    %v465 = vand.u32 %v42, 4294901760
    %v466 = vsub.f32 %v42, %v465
    %467 = vmatpush1.msra.mxu0 %v466
    %468 = vmatprep.subr.mxu0 0.0
    %v469 = vand.u32 %v43, 4294901760
    %v470 = vsub.f32 %v43, %v469
    %471 = vmatpush1.msra.mxu0 %v470
    %472 = vmatprep.subr.mxu0 0.0
    %v473 = vand.u32 %v44, 4294901760
    %v474 = vsub.f32 %v44, %v473
    %475 = vmatpush1.msra.mxu0 %v474
    %476 = vmatprep.subr.mxu0 0.0
    %v477 = vand.u32 %v45, 4294901760
    %v478 = vsub.f32 %v45, %v477
    %479 = vmatpush1.msra.mxu0 %v478
    %480 = vmatprep.subr.mxu0 0.0
    %v481 = vand.u32 %v46, 4294901760
    %v482 = vsub.f32 %v46, %v481
    %483 = vmatpush1.msra.mxu0 %v482
    %484 = vmatprep.subr.mxu0 0.0
    %v485 = vand.u32 %v47, 4294901760
    %v486 = vsub.f32 %v47, %v485
    %487 = vmatpush1.msra.mxu0 %v486
    %488 = vmatprep.subr.mxu0 0.0
    %v489 = vand.u32 %v48, 4294901760
    %v490 = vsub.f32 %v48, %v489
    %491 = vmatpush1.msra.mxu0 %v490
    %492 = vmatprep.subr.mxu0 0.0
    %v493 = vand.u32 %v49, 4294901760
    %v494 = vsub.f32 %v49, %v493
    %495 = vmatpush1.msra.mxu0 %v494
    %496 = vmatprep.subr.mxu0 0.0
    %v497 = vand.u32 %v50, 4294901760
    %v498 = vsub.f32 %v50, %v497
    %499 = vmatpush1.msra.mxu0 %v498
    %500 = vmatprep.subr.mxu0 0.0
    %v501 = vand.u32 %v51, 4294901760
    %v502 = vsub.f32 %v51, %v501
    %503 = vmatpush1.msra.mxu0 %v502
    %504 = vmatprep.subr.mxu0 0.0
    %v505 = vand.u32 %v52, 4294901760
    %v506 = vsub.f32 %v52, %v505
    %507 = vmatpush1.msra.mxu0 %v506
    %508 = vmatprep.subr.mxu0 0.0
    %v509 = vand.u32 %v53, 4294901760
    %v510 = vsub.f32 %v53, %v509
    %511 = vmatpush1.msra.mxu0 %v510
    %512 = vmatprep.subr.mxu0 0.0
    %v513 = vand.u32 %v54, 4294901760
    %v514 = vsub.f32 %v54, %v513
    %515 = vmatpush1.msra.mxu0 %v514
    %516 = vmatprep.subr.mxu0 0.0
    %v517 = vand.u32 %v55, 4294901760
    %v518 = vsub.f32 %v55, %v517
    %519 = vmatpush1.msra.mxu0 %v518
    %520 = vmatprep.subr.mxu0 0.0
    %v521 = vand.u32 %v56, 4294901760
    %v522 = vsub.f32 %v56, %v521
    %523 = vmatpush1.msra.mxu0 %v522
    %524 = vmatprep.subr.mxu0 0.0
    %v525 = vand.u32 %v57, 4294901760
    %v526 = vsub.f32 %v57, %v525
    %527 = vmatpush1.msra.mxu0 %v526
    %528 = vmatprep.subr.mxu0 0.0
    %v529 = vand.u32 %v58, 4294901760
    %v530 = vsub.f32 %v58, %v529
    %531 = vmatpush1.msra.mxu0 %v530
    %532 = vmatprep.subr.mxu0 0.0
    %v533 = vand.u32 %v59, 4294901760
    %v534 = vsub.f32 %v59, %v533
    %535 = vmatpush1.msra.mxu0 %v534
    %536 = vmatprep.subr.mxu0 0.0
    %v537 = vand.u32 %v60, 4294901760
    %v538 = vsub.f32 %v60, %v537
    %539 = vmatpush1.msra.mxu0 %v538
    %540 = vmatprep.subr.mxu0 0.0
    %v541 = vand.u32 %v61, 4294901760
    %v542 = vsub.f32 %v61, %v541
    %543 = vmatpush1.msra.mxu0 %v542
    %544 = vmatprep.subr.mxu0 0.0
    %v545 = vand.u32 %v62, 4294901760
    %v546 = vsub.f32 %v62, %v545
    %547 = vmatpush1.msra.mxu0 %v546
    %v548 = vand.u32 %v73, 4294901760
    %v549 = vsub.f32 %v73, %v548
    %550 = vmatprep.mubr.f32.mxu0 %v549
    %v551 = vand.u32 %v69, 4294901760
    %v552 = vsub.f32 %v69, %v551
    %553 = vmatmul.mubr.f32.gmra.mrb[0].mxu0 %v552
    %v554 = vpop.f32.mrb[0].mxu0
    %v555 = vadd.f32 %v417, %v554
    %v556 = vpop.f32.mrb[0].mxu0
    %557 = vdwg.mxu0
    %558 = vmatprep.subr.mxu0 0.0
    %v559 = vand.u32 %v31, 4294901760
    %560 = vmatpush1.msra.mxu0 %v559
    %561 = vmatprep.subr.mxu0 0.0
    %v562 = vand.u32 %v32, 4294901760
    %563 = vmatpush1.msra.mxu0 %v562
    %564 = vmatprep.subr.mxu0 0.0
    %v565 = vand.u32 %v33, 4294901760
    %566 = vmatpush1.msra.mxu0 %v565
    %567 = vmatprep.subr.mxu0 0.0
    %v568 = vand.u32 %v34, 4294901760
    %569 = vmatpush1.msra.mxu0 %v568
    %570 = vmatprep.subr.mxu0 0.0
    %v571 = vand.u32 %v35, 4294901760
    %572 = vmatpush1.msra.mxu0 %v571
    %573 = vmatprep.subr.mxu0 0.0
    %v574 = vand.u32 %v36, 4294901760
    %575 = vmatpush1.msra.mxu0 %v574
    %576 = vmatprep.subr.mxu0 0.0
    %v577 = vand.u32 %v37, 4294901760
    %578 = vmatpush1.msra.mxu0 %v577
    %579 = vmatprep.subr.mxu0 0.0
    %v580 = vand.u32 %v38, 4294901760
    %581 = vmatpush1.msra.mxu0 %v580
    %582 = vmatprep.subr.mxu0 0.0
    %v583 = vand.u32 %v39, 4294901760
    %584 = vmatpush1.msra.mxu0 %v583
    %585 = vmatprep.subr.mxu0 0.0
    %v586 = vand.u32 %v40, 4294901760
    %587 = vmatpush1.msra.mxu0 %v586
    %588 = vmatprep.subr.mxu0 0.0
    %v589 = vand.u32 %v41, 4294901760
    %590 = vmatpush1.msra.mxu0 %v589
    %591 = vmatprep.subr.mxu0 0.0
    %v592 = vand.u32 %v42, 4294901760
    %593 = vmatpush1.msra.mxu0 %v592
    %594 = vmatprep.subr.mxu0 0.0
    %v595 = vand.u32 %v43, 4294901760
    %596 = vmatpush1.msra.mxu0 %v595
    %597 = vmatprep.subr.mxu0 0.0
    %v598 = vand.u32 %v44, 4294901760
    %599 = vmatpush1.msra.mxu0 %v598
    %600 = vmatprep.subr.mxu0 0.0
    %v601 = vand.u32 %v45, 4294901760
    %602 = vmatpush1.msra.mxu0 %v601
    %603 = vmatprep.subr.mxu0 0.0
    %v604 = vand.u32 %v46, 4294901760
    %605 = vmatpush1.msra.mxu0 %v604
    %606 = vmatprep.subr.mxu0 0.0
    %v607 = vand.u32 %v47, 4294901760
    %608 = vmatpush1.msra.mxu0 %v607
    %609 = vmatprep.subr.mxu0 0.0
    %v610 = vand.u32 %v48, 4294901760
    %611 = vmatpush1.msra.mxu0 %v610
    %612 = vmatprep.subr.mxu0 0.0
    %v613 = vand.u32 %v49, 4294901760
    %614 = vmatpush1.msra.mxu0 %v613
    %615 = vmatprep.subr.mxu0 0.0
    %v616 = vand.u32 %v50, 4294901760
    %617 = vmatpush1.msra.mxu0 %v616
    %618 = vmatprep.subr.mxu0 0.0
    %v619 = vand.u32 %v51, 4294901760
    %620 = vmatpush1.msra.mxu0 %v619
    %621 = vmatprep.subr.mxu0 0.0
    %v622 = vand.u32 %v52, 4294901760
    %623 = vmatpush1.msra.mxu0 %v622
    %624 = vmatprep.subr.mxu0 0.0
    %v625 = vand.u32 %v53, 4294901760
    %626 = vmatpush1.msra.mxu0 %v625
    %627 = vmatprep.subr.mxu0 0.0
    %v628 = vand.u32 %v54, 4294901760
    %629 = vmatpush1.msra.mxu0 %v628
    %630 = vmatprep.subr.mxu0 0.0
    %v631 = vand.u32 %v55, 4294901760
    %632 = vmatpush1.msra.mxu0 %v631
    %633 = vmatprep.subr.mxu0 0.0
    %v634 = vand.u32 %v56, 4294901760
    %635 = vmatpush1.msra.mxu0 %v634
    %636 = vmatprep.subr.mxu0 0.0
    %v637 = vand.u32 %v57, 4294901760
    %638 = vmatpush1.msra.mxu0 %v637
    %639 = vmatprep.subr.mxu0 0.0
    %v640 = vand.u32 %v58, 4294901760
    %641 = vmatpush1.msra.mxu0 %v640
    %642 = vmatprep.subr.mxu0 0.0
    %v643 = vand.u32 %v59, 4294901760
    %644 = vmatpush1.msra.mxu0 %v643
    %645 = vmatprep.subr.mxu0 0.0
    %v646 = vand.u32 %v60, 4294901760
    %647 = vmatpush1.msra.mxu0 %v646
    %648 = vmatprep.subr.mxu0 0.0
    %v649 = vand.u32 %v61, 4294901760
    %650 = vmatpush1.msra.mxu0 %v649
    %651 = vmatprep.subr.mxu0 0.0
    %v652 = vand.u32 %v62, 4294901760
    %653 = vmatpush1.msra.mxu0 %v652
    %v654 = vand.u32 %v73, 4294901760
    %v655 = vsub.f32 %v73, %v654
    %v656 = vand.u32 %v655, 4294901760
    %657 = vmatprep.mubr.f32.mxu0 %v656
    %v658 = vand.u32 %v69, 4294901760
    %v659 = vsub.f32 %v69, %v658
    %v660 = vand.u32 %v659, 4294901760
    %661 = vmatmul.mubr.f32.gmra.mrb[0].mxu0 %v660
    %v662 = vpop.f32.mrb[0].mxu0
    %v663 = vadd.f32 %v555, %v662
    %v664 = vpop.f32.mrb[0].mxu0
    %665 = vdwg.mxu0
    %666 = vmatprep.subr.mxu0 0.0
    %v667 = vand.u32 %v31, 4294901760
    %v668 = vsub.f32 %v31, %v667
    %v669 = vand.u32 %v668, 4294901760
    %670 = vmatpush1.msra.mxu0 %v669
    %671 = vmatprep.subr.mxu0 0.0
    %v672 = vand.u32 %v32, 4294901760
    %v673 = vsub.f32 %v32, %v672
    %v674 = vand.u32 %v673, 4294901760
    %675 = vmatpush1.msra.mxu0 %v674
    %676 = vmatprep.subr.mxu0 0.0
    %v677 = vand.u32 %v33, 4294901760
    %v678 = vsub.f32 %v33, %v677
    %v679 = vand.u32 %v678, 4294901760
    %680 = vmatpush1.msra.mxu0 %v679
    %681 = vmatprep.subr.mxu0 0.0
    %v682 = vand.u32 %v34, 4294901760
    %v683 = vsub.f32 %v34, %v682
    %v684 = vand.u32 %v683, 4294901760
    %685 = vmatpush1.msra.mxu0 %v684
    %686 = vmatprep.subr.mxu0 0.0
    %v687 = vand.u32 %v35, 4294901760
    %v688 = vsub.f32 %v35, %v687
    %v689 = vand.u32 %v688, 4294901760
    %690 = vmatpush1.msra.mxu0 %v689
    %691 = vmatprep.subr.mxu0 0.0
    %v692 = vand.u32 %v36, 4294901760
    %v693 = vsub.f32 %v36, %v692
    %v694 = vand.u32 %v693, 4294901760
    %695 = vmatpush1.msra.mxu0 %v694
    %696 = vmatprep.subr.mxu0 0.0
    %v697 = vand.u32 %v37, 4294901760
    %v698 = vsub.f32 %v37, %v697
    %v699 = vand.u32 %v698, 4294901760
    %700 = vmatpush1.msra.mxu0 %v699
    %701 = vmatprep.subr.mxu0 0.0
    %v702 = vand.u32 %v38, 4294901760
    %v703 = vsub.f32 %v38, %v702
    %v704 = vand.u32 %v703, 4294901760
    %705 = vmatpush1.msra.mxu0 %v704
    %706 = vmatprep.subr.mxu0 0.0
    %v707 = vand.u32 %v39, 4294901760
    %v708 = vsub.f32 %v39, %v707
    %v709 = vand.u32 %v708, 4294901760
    %710 = vmatpush1.msra.mxu0 %v709
    %711 = vmatprep.subr.mxu0 0.0
    %v712 = vand.u32 %v40, 4294901760
    %v713 = vsub.f32 %v40, %v712
    %v714 = vand.u32 %v713, 4294901760
    %715 = vmatpush1.msra.mxu0 %v714
    %716 = vmatprep.subr.mxu0 0.0
    %v717 = vand.u32 %v41, 4294901760
    %v718 = vsub.f32 %v41, %v717
    %v719 = vand.u32 %v718, 4294901760
    %720 = vmatpush1.msra.mxu0 %v719
    %721 = vmatprep.subr.mxu0 0.0
    %v722 = vand.u32 %v42, 4294901760
    %v723 = vsub.f32 %v42, %v722
    %v724 = vand.u32 %v723, 4294901760
    %725 = vmatpush1.msra.mxu0 %v724
    %726 = vmatprep.subr.mxu0 0.0
    %v727 = vand.u32 %v43, 4294901760
    %v728 = vsub.f32 %v43, %v727
    %v729 = vand.u32 %v728, 4294901760
    %730 = vmatpush1.msra.mxu0 %v729
    %731 = vmatprep.subr.mxu0 0.0
    %v732 = vand.u32 %v44, 4294901760
    %v733 = vsub.f32 %v44, %v732
    %v734 = vand.u32 %v733, 4294901760
    %735 = vmatpush1.msra.mxu0 %v734
    %736 = vmatprep.subr.mxu0 0.0
    %v737 = vand.u32 %v45, 4294901760
    %v738 = vsub.f32 %v45, %v737
    %v739 = vand.u32 %v738, 4294901760
    %740 = vmatpush1.msra.mxu0 %v739
    %741 = vmatprep.subr.mxu0 0.0
    %v742 = vand.u32 %v46, 4294901760
    %v743 = vsub.f32 %v46, %v742
    %v744 = vand.u32 %v743, 4294901760
    %745 = vmatpush1.msra.mxu0 %v744
    %746 = vmatprep.subr.mxu0 0.0
    %v747 = vand.u32 %v47, 4294901760
    %v748 = vsub.f32 %v47, %v747
    %v749 = vand.u32 %v748, 4294901760
    %750 = vmatpush1.msra.mxu0 %v749
    %751 = vmatprep.subr.mxu0 0.0
    %v752 = vand.u32 %v48, 4294901760
    %v753 = vsub.f32 %v48, %v752
    %v754 = vand.u32 %v753, 4294901760
    %755 = vmatpush1.msra.mxu0 %v754
    %756 = vmatprep.subr.mxu0 0.0
    %v757 = vand.u32 %v49, 4294901760
    %v758 = vsub.f32 %v49, %v757
    %v759 = vand.u32 %v758, 4294901760
    %760 = vmatpush1.msra.mxu0 %v759
    %761 = vmatprep.subr.mxu0 0.0
    %v762 = vand.u32 %v50, 4294901760
    %v763 = vsub.f32 %v50, %v762
    %v764 = vand.u32 %v763, 4294901760
    %765 = vmatpush1.msra.mxu0 %v764
    %766 = vmatprep.subr.mxu0 0.0
    %v767 = vand.u32 %v51, 4294901760
    %v768 = vsub.f32 %v51, %v767
    %v769 = vand.u32 %v768, 4294901760
    %770 = vmatpush1.msra.mxu0 %v769
    %771 = vmatprep.subr.mxu0 0.0
    %v772 = vand.u32 %v52, 4294901760
    %v773 = vsub.f32 %v52, %v772
    %v774 = vand.u32 %v773, 4294901760
    %775 = vmatpush1.msra.mxu0 %v774
    %776 = vmatprep.subr.mxu0 0.0
    %v777 = vand.u32 %v53, 4294901760
    %v778 = vsub.f32 %v53, %v777
    %v779 = vand.u32 %v778, 4294901760
    %780 = vmatpush1.msra.mxu0 %v779
    %781 = vmatprep.subr.mxu0 0.0
    %v782 = vand.u32 %v54, 4294901760
    %v783 = vsub.f32 %v54, %v782
    %v784 = vand.u32 %v783, 4294901760
    %785 = vmatpush1.msra.mxu0 %v784
    %786 = vmatprep.subr.mxu0 0.0
    %v787 = vand.u32 %v55, 4294901760
    %v788 = vsub.f32 %v55, %v787
    %v789 = vand.u32 %v788, 4294901760
    %790 = vmatpush1.msra.mxu0 %v789
    %791 = vmatprep.subr.mxu0 0.0
    %v792 = vand.u32 %v56, 4294901760
    %v793 = vsub.f32 %v56, %v792
    %v794 = vand.u32 %v793, 4294901760
    %795 = vmatpush1.msra.mxu0 %v794
    %796 = vmatprep.subr.mxu0 0.0
    %v797 = vand.u32 %v57, 4294901760
    %v798 = vsub.f32 %v57, %v797
    %v799 = vand.u32 %v798, 4294901760
    %800 = vmatpush1.msra.mxu0 %v799
    %801 = vmatprep.subr.mxu0 0.0
    %v802 = vand.u32 %v58, 4294901760
    %v803 = vsub.f32 %v58, %v802
    %v804 = vand.u32 %v803, 4294901760
    %805 = vmatpush1.msra.mxu0 %v804
    %806 = vmatprep.subr.mxu0 0.0
    %v807 = vand.u32 %v59, 4294901760
    %v808 = vsub.f32 %v59, %v807
    %v809 = vand.u32 %v808, 4294901760
    %810 = vmatpush1.msra.mxu0 %v809
    %811 = vmatprep.subr.mxu0 0.0
    %v812 = vand.u32 %v60, 4294901760
    %v813 = vsub.f32 %v60, %v812
    %v814 = vand.u32 %v813, 4294901760
    %815 = vmatpush1.msra.mxu0 %v814
    %816 = vmatprep.subr.mxu0 0.0
    %v817 = vand.u32 %v61, 4294901760
    %v818 = vsub.f32 %v61, %v817
    %v819 = vand.u32 %v818, 4294901760
    %820 = vmatpush1.msra.mxu0 %v819
    %821 = vmatprep.subr.mxu0 0.0
    %v822 = vand.u32 %v62, 4294901760
    %v823 = vsub.f32 %v62, %v822
    %v824 = vand.u32 %v823, 4294901760
    %825 = vmatpush1.msra.mxu0 %v824
    %v826 = vand.u32 %v73, 4294901760
    %827 = vmatprep.mubr.f32.mxu0 %v826
    %v828 = vand.u32 %v69, 4294901760
    %829 = vmatmul.mubr.f32.gmra.mrb[0].mxu0 %v828
    %v830 = vpop.f32.mrb[0].mxu0
    %v831 = vadd.f32 %v663, %v830
    %v832 = vpop.f32.mrb[0].mxu0
    %833 = vdwg.mxu0
    %834 = vmatprep.subr.mxu0 0.0
    %v835 = vand.u32 %v31, 4294901760
    %836 = vmatpush1.msra.mxu0 %v835
    %837 = vmatprep.subr.mxu0 0.0
    %v838 = vand.u32 %v32, 4294901760
    %839 = vmatpush1.msra.mxu0 %v838
    %840 = vmatprep.subr.mxu0 0.0
    %v841 = vand.u32 %v33, 4294901760
    %842 = vmatpush1.msra.mxu0 %v841
    %843 = vmatprep.subr.mxu0 0.0
    %v844 = vand.u32 %v34, 4294901760
    %845 = vmatpush1.msra.mxu0 %v844
    %846 = vmatprep.subr.mxu0 0.0
    %v847 = vand.u32 %v35, 4294901760
    %848 = vmatpush1.msra.mxu0 %v847
    %849 = vmatprep.subr.mxu0 0.0
    %v850 = vand.u32 %v36, 4294901760
    %851 = vmatpush1.msra.mxu0 %v850
    %852 = vmatprep.subr.mxu0 0.0
    %v853 = vand.u32 %v37, 4294901760
    %854 = vmatpush1.msra.mxu0 %v853
    %855 = vmatprep.subr.mxu0 0.0
    %v856 = vand.u32 %v38, 4294901760
    %857 = vmatpush1.msra.mxu0 %v856
    %858 = vmatprep.subr.mxu0 0.0
    %v859 = vand.u32 %v39, 4294901760
    %860 = vmatpush1.msra.mxu0 %v859
    %861 = vmatprep.subr.mxu0 0.0
    %v862 = vand.u32 %v40, 4294901760
    %863 = vmatpush1.msra.mxu0 %v862
    %864 = vmatprep.subr.mxu0 0.0
    %v865 = vand.u32 %v41, 4294901760
    %866 = vmatpush1.msra.mxu0 %v865
    %867 = vmatprep.subr.mxu0 0.0
    %v868 = vand.u32 %v42, 4294901760
    %869 = vmatpush1.msra.mxu0 %v868
    %870 = vmatprep.subr.mxu0 0.0
    %v871 = vand.u32 %v43, 4294901760
    %872 = vmatpush1.msra.mxu0 %v871
    %873 = vmatprep.subr.mxu0 0.0
    %v874 = vand.u32 %v44, 4294901760
    %875 = vmatpush1.msra.mxu0 %v874
    %876 = vmatprep.subr.mxu0 0.0
    %v877 = vand.u32 %v45, 4294901760
    %878 = vmatpush1.msra.mxu0 %v877
    %879 = vmatprep.subr.mxu0 0.0
    %v880 = vand.u32 %v46, 4294901760
    %881 = vmatpush1.msra.mxu0 %v880
    %882 = vmatprep.subr.mxu0 0.0
    %v883 = vand.u32 %v47, 4294901760
    %884 = vmatpush1.msra.mxu0 %v883
    %885 = vmatprep.subr.mxu0 0.0
    %v886 = vand.u32 %v48, 4294901760
    %887 = vmatpush1.msra.mxu0 %v886
    %888 = vmatprep.subr.mxu0 0.0
    %v889 = vand.u32 %v49, 4294901760
    %890 = vmatpush1.msra.mxu0 %v889
    %891 = vmatprep.subr.mxu0 0.0
    %v892 = vand.u32 %v50, 4294901760
    %893 = vmatpush1.msra.mxu0 %v892
    %894 = vmatprep.subr.mxu0 0.0
    %v895 = vand.u32 %v51, 4294901760
    %896 = vmatpush1.msra.mxu0 %v895
    %897 = vmatprep.subr.mxu0 0.0
    %v898 = vand.u32 %v52, 4294901760
    %899 = vmatpush1.msra.mxu0 %v898
    %900 = vmatprep.subr.mxu0 0.0
    %v901 = vand.u32 %v53, 4294901760
    %902 = vmatpush1.msra.mxu0 %v901
    %903 = vmatprep.subr.mxu0 0.0
    %v904 = vand.u32 %v54, 4294901760
    %905 = vmatpush1.msra.mxu0 %v904
    %906 = vmatprep.subr.mxu0 0.0
    %v907 = vand.u32 %v55, 4294901760
    %908 = vmatpush1.msra.mxu0 %v907
    %909 = vmatprep.subr.mxu0 0.0
    %v910 = vand.u32 %v56, 4294901760
    %911 = vmatpush1.msra.mxu0 %v910
    %912 = vmatprep.subr.mxu0 0.0
    %v913 = vand.u32 %v57, 4294901760
    %914 = vmatpush1.msra.mxu0 %v913
    %915 = vmatprep.subr.mxu0 0.0
    %v916 = vand.u32 %v58, 4294901760
    %917 = vmatpush1.msra.mxu0 %v916
    %918 = vmatprep.subr.mxu0 0.0
    %v919 = vand.u32 %v59, 4294901760
    %920 = vmatpush1.msra.mxu0 %v919
    %921 = vmatprep.subr.mxu0 0.0
    %v922 = vand.u32 %v60, 4294901760
    %923 = vmatpush1.msra.mxu0 %v922
    %924 = vmatprep.subr.mxu0 0.0
    %v925 = vand.u32 %v61, 4294901760
    %926 = vmatpush1.msra.mxu0 %v925
    %927 = vmatprep.subr.mxu0 0.0
    %v928 = vand.u32 %v62, 4294901760
    %929 = vmatpush1.msra.mxu0 %v928
    %v930 = vand.u32 %v73, 4294901760
    %931 = vmatprep.mubr.f32.mxu0 %v930
    %v932 = vand.u32 %v69, 4294901760
    %933 = vmatmul.mubr.f32.gmra.mrb[0].mxu0 %v932
    %v934 = vpop.f32.mrb[0].mxu0
    %v935 = vadd.f32 %v831, %v934
    %v936 = vpop.f32.mrb[0].mxu0
    %937 = vdwg.mxu0
    %v938 = vmul.f32 %v935, 0.5
    %v939 = vtanh.pop %v938
    %v940 = vmul.f32 %v939, 0.5
    %v941 = vadd.f32 %v940, 0.5
    %942 = vst [vmem:[#allocation6] sm:$0x1] %v941
    // Predicated region
    $region18: #{tpu_custom_call.1} parent=1 // pred_check
      _
    $region19: #{tpu_custom_call.1} parent=1 // pred_check_branch
      %944 = sbr.rel (0) target = $region21
    $region20: #{tpu_custom_call.1} parent=1 // pred_region
      %s946 = ssub.s32 16, 16
      %947 = vsyncadd [#allocation5], %s946
      %s949 = sshll.u32 [#allocation6], 4
      %s950 = int_to_ptr.vmem [resolvable:$true] %s949
      %952 = dma.vmem_to_hbm [thread:$0]  %s950, 16, %s3, [#allocation5]
    $region21: #{tpu_custom_call.1} parent=1 // pred_fallthru
      _
    // Predicated region
    $region22: #{tpu_custom_call.1} parent=1 // pred_check
      _
    $region23: #{tpu_custom_call.1} parent=1 // pred_check_branch
      %954 = sbr.rel (0) target = $region25
    $region24: #{tpu_custom_call.1} parent=1 // pred_region
      %955 = dma.done [#allocation5], 16
    $region25: #{tpu_custom_call.1} parent=1 // pred_fallthru
      _
    %956 = vsyncpa [#allocation4], 1
    %957 = vsyncpa [#allocation5], 1

</llo_original>
